<compile_context>
chip_gen: v6e
topology: v6e:2x2x1
jax: 0.10.0
libtpu: 0.0.40
codegen_flags: <defaults>
</compile_context>

<pallas_src>
import jax
import jax.numpy as jnp
from jax.experimental import pallas as pl
from jax.experimental.pallas import tpu as pltpu


def _copy_kernel(x_ref, o_ref):
    # Pure pass-through: the reference module defines no computation.
    o_ref[...] = x_ref[...]


def _choose_lane_width(total: int):
    """Largest lane width in {1024, 512, 256, 128} that divides `total`."""
    for cand in (1024, 512, 256, 128):
        if total % cand == 0:
            return cand
    return None


def _choose_block_rows(rows: int, lane_w: int, itemsize: int) -> int:
    """~2 MiB blocks (multiple-of-8 rows), or the full row extent if smaller."""
    target_bytes = 2 * 1024 * 1024
    max_rows = max(8, target_bytes // (lane_w * itemsize))
    max_rows = (max_rows // 8) * 8
    if rows <= max_rows:
        return rows  # full-extent block (bypasses the 8-row divisibility rule)
    return max_rows


def inception_module_v3_forward(x: jax.Array, *, alias_input: bool = False) -> jax.Array:
    """Pallas implementation of InceptionModulev3.forward (a no-op module).

    Returns the input unchanged (identity), computed through a lane-dense,
    coarsely-tiled Pallas copy kernel.  With `alias_input=True` the output is
    aliased to the input buffer (no HBM traffic); the caller must then treat
    `x` as donated.
    """
    total = x.size
    itemsize = jnp.dtype(x.dtype).itemsize
    lane_w = _choose_lane_width(total)

    if lane_w is None:
        # Oddly-sized tiny input: single full-extent block (block dims equal
        # the array dims, so the (8, 128) divisibility rule does not apply).
        return pl.pallas_call(
            _copy_kernel,
            out_shape=jax.ShapeDtypeStruct(x.shape, x.dtype),
            input_output_aliases={0: 0} if alias_input else {},
        )(x)

    rows = total // lane_w
    block_rows = _choose_block_rows(rows, lane_w, itemsize)
    # Contiguous row-major reshape: pure layout plumbing, no data movement.
    flat = x.reshape(rows, lane_w)

    grid = (pl.cdiv(rows, block_rows),)
    spec = pl.BlockSpec((block_rows, lane_w), lambda i: (i, 0))

    out_flat = pl.pallas_call(
        _copy_kernel,
        out_shape=jax.ShapeDtypeStruct((rows, lane_w), x.dtype),
        grid_spec=pltpu.PrefetchScalarGridSpec(
            num_scalar_prefetch=0,
            grid=grid,
            in_specs=[spec],
            out_specs=spec,
        ),
        compiler_params=pltpu.CompilerParams(
            # Single "parallel" axis: a no-op on single-TC v5e/v6e, lets v7x
            # shard multi-block copies across its 2 TensorCores.
            dimension_semantics=("parallel",),
        ),
        input_output_aliases={0: 0} if alias_input else {},
    )(flat)
    return out_flat.reshape(x.shape)


if __name__ == "__main__":
    key = jax.random.PRNGKey(0)
    # Small NCHW input consistent with an Inception-style module.
    x = jax.random.normal(key, (2, 4, 16, 16), dtype=jnp.float32)

    y = inception_module_v3_forward(x)
    jax.block_until_ready(y)

    # Sanity check: identity pass-through must be exact.
    assert y.shape == x.shape and y.dtype == x.dtype
    assert bool(jnp.all(y == x))

    print("KERNEL_OK")
</pallas_src>

<mosaic_0001>
module attributes {stable_mosaic.version = 11 : i64} {
  func.func @_copy_kernel(%arg0: i32, %arg1: memref<2x1024xf32, #tpu.memory_space<vmem>>, %arg2: memref<2x1024xf32, #tpu.memory_space<vmem>>) attributes {dimension_semantics = [#tpu.dimension_semantics<parallel>], iteration_bounds = array<i64: 1>, scalar_prefetch = 0 : i64, scratch_operands = 0 : i64, tpu.core_type = #tpu.core_type<tc>, window_params = [{transform_indices = @transform_0, window_bounds = array<i64: 2, 1024>}, {transform_indices = @transform_1, window_bounds = array<i64: 2, 1024>}]} {
    %c0 = arith.constant 0 : index
    %c0_0 = arith.constant 0 : index
    %0 = vector.load %arg1[%c0, %c0_0] : memref<2x1024xf32, #tpu.memory_space<vmem>>, vector<2x1024xf32>
    %c0_1 = arith.constant 0 : index
    %c0_2 = arith.constant 0 : index
    %1 = vector.load %arg2[%c0_1, %c0_2] : memref<2x1024xf32, #tpu.memory_space<vmem>>, vector<2x1024xf32>
    tpu.vector_store %arg2[%c0_1, %c0_2], %0 {strides = array<i32>} : memref<2x1024xf32, #tpu.memory_space<vmem>>, vector<2x1024xf32>,
    return
  }
  func.func @transform_0(%arg0: i32) -> (i32, i32) {
    %c0_i32 = arith.constant 0 : i32
    %c0_i32_0 = arith.constant 0 : i32
    return %arg0, %c0_i32 : i32, i32
  }
  func.func @transform_1(%arg0: i32) -> (i32, i32) {
    %c0_i32 = arith.constant 0 : i32
    %c0_i32_0 = arith.constant 0 : i32
    return %arg0, %c0_i32 : i32, i32
  }
}

</mosaic_0001>

<llo_original>
// kernel: tpu_custom_call.1
$region0: #{tpu_custom_call.1}
  #allocation0 [shape = 'u32[]', space=smem, size = 0x4, offset = 0x4, fixed_abs, tag = 'smem constant byte address 0x4 - core index']
  #allocation1 [shape = 'u32[144,128]{1,0:T(1,128)}', space=vmem, size = 0x12000, scoped, tag = 'internal scratch']
  %s0 = inlined_call_operand.hbm [shape: f32[2,1024], index: 0, kind: input, shape index: {}]
  %s1 = inlined_call_operand.hbm [shape: f32[2,1024], index: 1, kind: output, shape index: {}]
  %s2 = sld [smem:[#allocation0]]
  $region18: #{tpu_custom_call.1} parent=0
    _
  %s4 = ssub.s32 1, %s2
  %s5 = scalar_select 0, %s4, %s2
  $region1: #{tpu_custom_call.1} parent=0
    #allocation2 [shape = 'u8[8192]{0}', space=vmem, size = 0x2000, scoped, tag = 'input window, operand 0, single buffered']
    #allocation3 [shape = 's32[1]{0}', space=sflag, size = 0x4, scoped, tag = 'scoped memory for tpu_custom_call.1']
    #allocation4 [shape = 's32[1]{0}', space=sflag, size = 0x4, scoped, tag = 'scoped memory for tpu_custom_call.1']
    #allocation5 [shape = 'u8[8192]{0}', space=vmem, size = 0x2000, scoped, tag = 'output window, operand 0, single buffered']
    %6 = vsyncpa [#allocation3], 0
    %7 = vsyncpa [#allocation4], 0
    // Predicated region
    $region2: #{tpu_custom_call.1} parent=1 // pred_check
      _
    $region3: #{tpu_custom_call.1} parent=1 // pred_check_branch
      %9 = sbr.rel (0) target = $region5
    $region4: #{tpu_custom_call.1} parent=1 // pred_region
      %s11 = ssub.s32 256, 256
      %12 = vsyncadd [#allocation3], %s11
      %s14 = sshll.u32 [#allocation2], 4
      %s15 = int_to_ptr.vmem [resolvable:$true] %s14
      %17 = dma.hbm_to_vmem [thread:$0]  %s0, 256, %s15, [#allocation3]
    $region5: #{tpu_custom_call.1} parent=1 // pred_fallthru
      _
    // Predicated region
    $region6: #{tpu_custom_call.1} parent=1 // pred_check
      _
    $region7: #{tpu_custom_call.1} parent=1 // pred_check_branch
      %19 = sbr.rel (0) target = $region9
    $region8: #{tpu_custom_call.1} parent=1 // pred_region
      %20 = dma.done [#allocation3], 256
    $region9: #{tpu_custom_call.1} parent=1 // pred_fallthru
      _
    %v21 = vld [vmem:[#allocation2] sm:$0xff]
    %v22 = vld [vmem:[#allocation2 + $0x8] sm:$0xff]
    %23 = vst [vmem:[#allocation5] sm:$0xff] %v21
    %24 = vst [vmem:[#allocation5 + $0x8] sm:$0xff] %v22
    // Predicated region
    $region10: #{tpu_custom_call.1} parent=1 // pred_check
      _
    $region11: #{tpu_custom_call.1} parent=1 // pred_check_branch
      %26 = sbr.rel (0) target = $region13
    $region12: #{tpu_custom_call.1} parent=1 // pred_region
      %s28 = ssub.s32 256, 256
      %29 = vsyncadd [#allocation4], %s28
      %s31 = sshll.u32 [#allocation5], 4
      %s32 = int_to_ptr.vmem [resolvable:$true] %s31
      %34 = dma.vmem_to_hbm [thread:$0]  %s32, 256, %s1, [#allocation4]
    $region13: #{tpu_custom_call.1} parent=1 // pred_fallthru
      _
    // Predicated region
    $region14: #{tpu_custom_call.1} parent=1 // pred_check
      _
    $region15: #{tpu_custom_call.1} parent=1 // pred_check_branch
      %36 = sbr.rel (0) target = $region17
    $region16: #{tpu_custom_call.1} parent=1 // pred_region
      %37 = dma.done [#allocation4], 256
    $region17: #{tpu_custom_call.1} parent=1 // pred_fallthru
      _
    %38 = vsyncpa [#allocation3], 1
    %39 = vsyncpa [#allocation4], 1

</llo_original>
